<compile_context>
chip_gen: v7x
topology: tpu7x:2x2x1
jax: 0.10.0
libtpu: 0.0.40
codegen_flags: <defaults>
</compile_context>

<pallas_src>
import functools

import jax
import jax.numpy as jnp
from jax.experimental import pallas as pl
from jax.experimental.pallas import tpu as pltpu


def _complete_module_kernel(x0_ref, x1_ref,          # modality inputs (tb,D0),(tb,D1) f32
                            wenc_ref, benc_ref,      # block-diag encoder (D0+D1,2H),(1,2H)
                            wh_ref, bh_ref,          # head (2H,C),(1,C)
                            o_ref,                   # output (tb,C)
                            *, compute_dtype):
    cd = compute_dtype
    # Lane-concat the two modality tiles in VMEM (D0+D1 <= 128 lanes) and cast
    # to the compute dtype in-kernel (cast hides under DMA; no extra HBM pass).
    xcat = jnp.concatenate([x0_ref[...], x1_ref[...]], axis=-1).astype(cd)
    # Both encoders as ONE block-diagonal matmul; f32 accumulation.
    h = jnp.dot(xcat, wenc_ref[...].astype(cd),
                preferred_element_type=jnp.float32)
    h = jnp.maximum(h + benc_ref[...], 0.0)          # bias + ReLU in f32
    # fuse (Concat along features) + head (Linear) == single K=2H MXU matmul.
    out = jnp.dot(h.astype(cd), wh_ref[...].astype(cd),
                  preferred_element_type=jnp.float32)
    o_ref[...] = (out + bh_ref[...]).astype(o_ref.dtype)


@functools.partial(jax.jit,
                   static_argnames=("compute_dtype", "out_dtype", "tb", "use_kernel"))
def complete_module_forward(x0, x1, w0, b0, w1, b1, wh, bh,
                            *, compute_dtype=jnp.bfloat16, out_dtype=None,
                            tb=None, use_kernel=None):
    """Pallas forward of completeModule: [Linear+ReLU]x2 -> Concat -> Linear."""
    B, D0 = x0.shape
    _, D1 = x1.shape
    H = w0.shape[1]
    C = wh.shape[1]
    assert wh.shape[0] == 2 * H, "head weight must match concat([h0, h1])"

    cd = jnp.dtype(compute_dtype)
    od = jnp.dtype(out_dtype) if out_dtype is not None else cd

    # Small-workload fast path: pallas_call launch + 6 DMA streams dominate
    # below this size; let XLA fuse the tiny matmuls instead.
    if use_kernel is None:
        use_kernel = B * (D0 + D1) * 4 >= (256 << 10)
    if not use_kernel:
        h0 = jnp.maximum(x0 @ w0 + b0, 0.0)
        h1 = jnp.maximum(x1 @ w1 + b1, 0.0)
        fused = jnp.concatenate([h0, h1], axis=-1)
        return (fused @ wh + bh).astype(od)

    # Fold both encoders into one block-diagonal weight (tiny, trace-time).
    wenc = jnp.zeros((D0 + D1, 2 * H), dtype=jnp.float32)
    wenc = wenc.at[:D0, :H].set(w0.astype(jnp.float32))
    wenc = wenc.at[D0:, H:].set(w1.astype(jnp.float32))
    benc = jnp.concatenate([b0, b1]).reshape(1, 2 * H).astype(jnp.float32)
    bh_2d = bh.reshape(1, C).astype(jnp.float32)

    # ---- batch tile selection ------------------------------------------------
    # Per-row VMEM cost of the pipelined blocks (double-buffered f32 inputs +
    # double-buffered output) plus resident weights; budgeted conservatively so
    # it fits every generation (v7x: 64 MiB physical / 32 MiB scoped default,
    # v5e: 16 MiB scoped default -> raised via vmem_limit_bytes below).
    row_bytes = 2 * 4 * (D0 + D1) + 2 * od.itemsize * C
    weight_bytes = 2 * 4 * ((D0 + D1) * 2 * H + 2 * H * C + 2 * H + C)
    vmem_limit = 32 * 1024 * 1024
    block_budget = max(vmem_limit // 2 - weight_bytes, 8 * row_bytes)

    if tb is None:
        tb_cap = max(8, (block_budget // row_bytes) // 8 * 8)
        if B <= tb_cap:
            if B >= 2048:
                # keep >= 2 grid steps so both v7x TensorCores get work
                tb = (((B + 1) // 2) + 7) // 8 * 8
            else:
                tb = B            # single full-extent block (always legal)
        else:
            tb = tb_cap
    grid = (pl.cdiv(B, tb),)

    flops = 2 * B * ((D0 + D1) * 2 * H + 2 * H * C)
    bytes_accessed = (
        B * (D0 + D1) * 4                             # f32 activations in
        + ((D0 + D1) * 2 * H + 2 * H * C + 2 * H + C) * 4   # weights + biases
        + B * C * od.itemsize                         # output
    )
    cost = pl.CostEstimate(flops=flops, bytes_accessed=bytes_accessed,
                           transcendentals=0)

    def x_spec(d):
        return pl.BlockSpec((tb, d), lambda i: (i, 0))

    def resident_spec(shape):
        # constant index_map: weights/biases stay VMEM-resident across B tiles
        return pl.BlockSpec(shape, lambda i, _s=shape: (0,) * len(_s))

    kernel = functools.partial(_complete_module_kernel, compute_dtype=cd)

    return pl.pallas_call(
        kernel,
        out_shape=jax.ShapeDtypeStruct((B, C), od),
        grid=grid,
        in_specs=[
            x_spec(D0), x_spec(D1),
            resident_spec((D0 + D1, 2 * H)), resident_spec((1, 2 * H)),
            resident_spec((2 * H, C)), resident_spec((1, C)),
        ],
        out_specs=pl.BlockSpec((tb, C), lambda i: (i, 0)),
        compiler_params=pltpu.CompilerParams(
            dimension_semantics=("parallel",),
            vmem_limit_bytes=vmem_limit,
        ),
        cost_estimate=cost,
    )(x0, x1, wenc, benc, wh, bh_2d)


def _reference(x0, x1, w0, b0, w1, b1, wh, bh):
    h0 = jnp.maximum(x0 @ w0 + b0, 0.0)
    h1 = jnp.maximum(x1 @ w1 + b1, 0.0)
    fused = jnp.concatenate([h0, h1], axis=-1)
    return fused @ wh + bh


if __name__ == "__main__":
    # small shapes consistent with the module: 2 modalities, MLP encoders,
    # concat fuse, linear classification head
    B, D0, D1, H, C = 8, 16, 24, 32, 8

    key = jax.random.PRNGKey(0)
    k = jax.random.split(key, 10)
    x0 = jax.random.normal(k[0], (B, D0), dtype=jnp.float32)
    x1 = jax.random.normal(k[1], (B, D1), dtype=jnp.float32)
    # weights stored as (in, out) = W.T of torch Linear
    w0 = jax.random.normal(k[2], (D0, H), dtype=jnp.float32) * 0.1
    b0 = jax.random.normal(k[3], (H,), dtype=jnp.float32) * 0.1
    w1 = jax.random.normal(k[4], (D1, H), dtype=jnp.float32) * 0.1
    b1 = jax.random.normal(k[5], (H,), dtype=jnp.float32) * 0.1
    wh = jax.random.normal(k[6], (2 * H, C), dtype=jnp.float32) * 0.1
    bh = jax.random.normal(k[7], (C,), dtype=jnp.float32) * 0.1

    ref = _reference(x0, x1, w0, b0, w1, b1, wh, bh)

    # f32 path: exact-structure check (use_kernel=True forces the Pallas path
    # even though these demo shapes are below the fast-path threshold)
    out_f32 = complete_module_forward(x0, x1, w0, b0, w1, b1, wh, bh,
                                      compute_dtype=jnp.float32,
                                      use_kernel=True)
    out_f32 = jax.block_until_ready(out_f32)
    assert out_f32.shape == (B, C)
    assert jnp.allclose(out_f32, ref, atol=1e-4, rtol=1e-4)

    # bf16 path (default optimized path): in-kernel cast, bf16 output,
    # f32 accumulation -> loose tolerance for bf16 operand quantization
    out_bf16 = complete_module_forward(x0, x1, w0, b0, w1, b1, wh, bh,
                                       use_kernel=True)
    out_bf16 = jax.block_until_ready(out_bf16)
    assert out_bf16.shape == (B, C)
    assert out_bf16.dtype == jnp.bfloat16
    assert jnp.allclose(out_bf16.astype(jnp.float32), ref, atol=3e-2, rtol=3e-2)

    # larger, non-multiple-of-tile batch to exercise the tiled/ragged grid path
    B2 = 1000
    x0b = jax.random.normal(k[8], (B2, D0), dtype=jnp.float32)
    x1b = jax.random.normal(k[9], (B2, D1), dtype=jnp.float32)
    ref_b = _reference(x0b, x1b, w0, b0, w1, b1, wh, bh)
    out_b = complete_module_forward(x0b, x1b, w0, b0, w1, b1, wh, bh,
                                    tb=256, use_kernel=True)
    out_b = jax.block_until_ready(out_b)
    assert out_b.shape == (B2, C)
    assert jnp.allclose(out_b.astype(jnp.float32), ref_b, atol=3e-2, rtol=3e-2)

    print("KERNEL_OK")
</pallas_src>

<mosaic_0001>
module attributes {stable_mosaic.version = 11 : i64} {
  func.func @_complete_module_kernel(%arg0: i32, %arg1: memref<8x16xf32, #tpu.memory_space<vmem>>, %arg2: memref<8x24xf32, #tpu.memory_space<vmem>>, %arg3: memref<40x64xf32, #tpu.memory_space<vmem>>, %arg4: memref<1x64xf32, #tpu.memory_space<vmem>>, %arg5: memref<64x8xf32, #tpu.memory_space<vmem>>, %arg6: memref<1x8xf32, #tpu.memory_space<vmem>>, %arg7: memref<8x8xf32, #tpu.memory_space<vmem>>) attributes {dimension_semantics = [#tpu.dimension_semantics<parallel>], iteration_bounds = array<i64: 1>, scalar_prefetch = 0 : i64, scratch_operands = 0 : i64, tpu.core_type = #tpu.core_type<tc>, window_params = [{transform_indices = @transform_0, window_bounds = array<i64: 8, 16>}, {transform_indices = @transform_1, window_bounds = array<i64: 8, 24>}, {pipeline_mode = #tpu.pipeline_mode<synchronous>, transform_indices = @transform_2, window_bounds = array<i64: 40, 64>}, {pipeline_mode = #tpu.pipeline_mode<synchronous>, transform_indices = @transform_3, window_bounds = array<i64: 1, 64>}, {pipeline_mode = #tpu.pipeline_mode<synchronous>, transform_indices = @transform_4, window_bounds = array<i64: 64, 8>}, {pipeline_mode = #tpu.pipeline_mode<synchronous>, transform_indices = @transform_5, window_bounds = array<i64: 1, 8>}, {transform_indices = @transform_6, window_bounds = array<i64: 8, 8>}]} {
    %c0 = arith.constant 0 : index
    %c0_0 = arith.constant 0 : index
    %0 = vector.load %arg1[%c0, %c0_0] : memref<8x16xf32, #tpu.memory_space<vmem>>, vector<8x16xf32>
    %c0_1 = arith.constant 0 : index
    %c0_2 = arith.constant 0 : index
    %1 = vector.load %arg2[%c0_1, %c0_2] : memref<8x24xf32, #tpu.memory_space<vmem>>, vector<8x24xf32>
    %2 = tpu.concatenate %0, %1 in 1 : vector<8x16xf32>, vector<8x24xf32> -> vector<8x40xf32>
    %c0_3 = arith.constant 0 : index
    %c0_4 = arith.constant 0 : index
    %3 = vector.load %arg3[%c0_3, %c0_4] : memref<40x64xf32, #tpu.memory_space<vmem>>, vector<40x64xf32>
    %cst = arith.constant dense<0.000000e+00> : vector<8x64xf32>
    %4 = tpu.matmul %2, %3, %cst {dimension_numbers = #tpu.dot_dimension_numbers<[1], [0], [0], [1], [0, 0, 1, 1], [], []>} : vector<8x40xf32>, vector<40x64xf32>, vector<8x64xf32> -> vector<8x64xf32>
    %c0_5 = arith.constant 0 : index
    %c0_6 = arith.constant 0 : index
    %5 = vector.load %arg4[%c0_5, %c0_6] : memref<1x64xf32, #tpu.memory_space<vmem>>, vector<1x64xf32>
    %6 = vector.broadcast %5 : vector<1x64xf32> to vector<8x64xf32>
    %7 = arith.addf %4, %6 : vector<8x64xf32>
    %cst_7 = arith.constant 0.000000e+00 : f32
    %8 = vector.broadcast %cst_7 : f32 to vector<8x64xf32>
    %9 = arith.maximumf %7, %8 : vector<8x64xf32>
    %c0_8 = arith.constant 0 : index
    %c0_9 = arith.constant 0 : index
    %10 = vector.load %arg5[%c0_8, %c0_9] : memref<64x8xf32, #tpu.memory_space<vmem>>, vector<64x8xf32>
    %cst_10 = arith.constant dense<0.000000e+00> : vector<8x8xf32>
    %11 = tpu.matmul %9, %10, %cst_10 {dimension_numbers = #tpu.dot_dimension_numbers<[1], [0], [0], [1], [0, 0, 1, 1], [], []>} : vector<8x64xf32>, vector<64x8xf32>, vector<8x8xf32> -> vector<8x8xf32>
    %c0_11 = arith.constant 0 : index
    %c0_12 = arith.constant 0 : index
    %12 = vector.load %arg6[%c0_11, %c0_12] : memref<1x8xf32, #tpu.memory_space<vmem>>, vector<1x8xf32>
    %13 = vector.broadcast %12 : vector<1x8xf32> to vector<8x8xf32>
    %14 = arith.addf %11, %13 : vector<8x8xf32>
    %c0_13 = arith.constant 0 : index
    %c0_14 = arith.constant 0 : index
    %15 = vector.load %arg7[%c0_13, %c0_14] : memref<8x8xf32, #tpu.memory_space<vmem>>, vector<8x8xf32>
    tpu.vector_store %arg7[%c0_13, %c0_14], %14 {strides = array<i32>} : memref<8x8xf32, #tpu.memory_space<vmem>>, vector<8x8xf32>,
    return
  }
  func.func @transform_0(%arg0: i32) -> (i32, i32) {
    %c0_i32 = arith.constant 0 : i32
    %c0_i32_0 = arith.constant 0 : i32
    return %arg0, %c0_i32 : i32, i32
  }
  func.func @transform_1(%arg0: i32) -> (i32, i32) {
    %c0_i32 = arith.constant 0 : i32
    %c0_i32_0 = arith.constant 0 : i32
    return %arg0, %c0_i32 : i32, i32
  }
  func.func @transform_2(%arg0: i32) -> (i32, i32) {
    %c0_i32 = arith.constant 0 : i32
    %c0_i32_0 = arith.constant 0 : i32
    %c0_i32_1 = arith.constant 0 : i32
    return %c0_i32, %c0_i32_0 : i32, i32
  }
  func.func @transform_3(%arg0: i32) -> (i32, i32) {
    %c0_i32 = arith.constant 0 : i32
    %c0_i32_0 = arith.constant 0 : i32
    %c0_i32_1 = arith.constant 0 : i32
    return %c0_i32, %c0_i32_0 : i32, i32
  }
  func.func @transform_4(%arg0: i32) -> (i32, i32) {
    %c0_i32 = arith.constant 0 : i32
    %c0_i32_0 = arith.constant 0 : i32
    %c0_i32_1 = arith.constant 0 : i32
    return %c0_i32, %c0_i32_0 : i32, i32
  }
  func.func @transform_5(%arg0: i32) -> (i32, i32) {
    %c0_i32 = arith.constant 0 : i32
    %c0_i32_0 = arith.constant 0 : i32
    %c0_i32_1 = arith.constant 0 : i32
    return %c0_i32, %c0_i32_0 : i32, i32
  }
  func.func @transform_6(%arg0: i32) -> (i32, i32) {
    %c0_i32 = arith.constant 0 : i32
    %c0_i32_0 = arith.constant 0 : i32
    return %arg0, %c0_i32 : i32, i32
  }
}

</mosaic_0001>

<llo_original>
// kernel: complete_module_forward.1
$region0: #{complete_module_forward.1}
  #allocation0 [shape = 'u32[]', space=smem, size = 0x4, offset = 0x4, fixed_abs, tag = 'smem constant byte address 0x4 - core index']
  #allocation1 [shape = 'u32[144,128]{1,0:T(1,128)}', space=vmem, size = 0x12000, scoped, tag = 'internal scratch']
  %s0 = inlined_call_operand.vmem [shape: f32[8,16], index: 0, kind: input, shape index: {}]
  %s1 = inlined_call_operand.vmem [shape: f32[8,24], index: 1, kind: input, shape index: {}]
  %s2 = inlined_call_operand.vmem [shape: f32[40,64], index: 2, kind: input, shape index: {}]
  %s3 = inlined_call_operand.vmem [shape: f32[1,64], index: 3, kind: input, shape index: {}]
  %s4 = inlined_call_operand.vmem [shape: f32[64,8], index: 4, kind: input, shape index: {}]
  %s5 = inlined_call_operand.vmem [shape: f32[1,8], index: 5, kind: input, shape index: {}]
  %s6 = inlined_call_operand.hbm [shape: f32[8,8], index: 6, kind: output, shape index: {}]
  %s7 = sld [smem:[#allocation0]]
  $region34: #{complete_module_forward.1} parent=0
    _
  %s9 = ssub.s32 1, %s7
  %s10 = scalar_select 0, %s9, %s7
  $region1: #{complete_module_forward.1} parent=0
    #allocation2 [shape = 'u8[4096]{0}', space=vmem, size = 0x1000, scoped, tag = 'output window, operand 0, single buffered']
    #allocation3 [shape = 's32[1]{0}', space=sflag, size = 0x4, scoped, tag = 'scoped memory for complete_module_forward.1']
    %11 = vsyncpa [#allocation3], 0
    // Predicated region
    $region2: #{complete_module_forward.1} parent=1 // pred_check
      _
    $region3: #{complete_module_forward.1} parent=1 // pred_check_branch
      %13 = sbr.rel (0) target = $region5
    $region4: #{complete_module_forward.1} parent=1 // pred_region
      _
    $region5: #{complete_module_forward.1} parent=1 // pred_fallthru
      _
    // Predicated region
    $region6: #{complete_module_forward.1} parent=1 // pred_check
      _
    $region7: #{complete_module_forward.1} parent=1 // pred_check_branch
      %15 = sbr.rel (0) target = $region9
    $region8: #{complete_module_forward.1} parent=1 // pred_region
      _
    $region9: #{complete_module_forward.1} parent=1 // pred_fallthru
      _
    // Predicated region
    $region10: #{complete_module_forward.1} parent=1 // pred_check
      _
    $region11: #{complete_module_forward.1} parent=1 // pred_check_branch
      %17 = sbr.rel (0) target = $region13
    $region12: #{complete_module_forward.1} parent=1 // pred_region
      _
    $region13: #{complete_module_forward.1} parent=1 // pred_fallthru
      _
    // Predicated region
    $region14: #{complete_module_forward.1} parent=1 // pred_check
      _
    $region15: #{complete_module_forward.1} parent=1 // pred_check_branch
      %19 = sbr.rel (0) target = $region17
    $region16: #{complete_module_forward.1} parent=1 // pred_region
      _
    $region17: #{complete_module_forward.1} parent=1 // pred_fallthru
      _
    // Predicated region
    $region18: #{complete_module_forward.1} parent=1 // pred_check
      _
    $region19: #{complete_module_forward.1} parent=1 // pred_check_branch
      %21 = sbr.rel (0) target = $region21
    $region20: #{complete_module_forward.1} parent=1 // pred_region
      _
    $region21: #{complete_module_forward.1} parent=1 // pred_fallthru
      _
    // Predicated region
    $region22: #{complete_module_forward.1} parent=1 // pred_check
      _
    $region23: #{complete_module_forward.1} parent=1 // pred_check_branch
      %23 = sbr.rel (0) target = $region25
    $region24: #{complete_module_forward.1} parent=1 // pred_region
      _
    $region25: #{complete_module_forward.1} parent=1 // pred_fallthru
      _
    %v24 = vld [vmem:[%s0] sm:$0xff]
    %v25 = vld [vmem:[%s1] sm:$0xff]
    %27 = vrot.lane.b32.xlu0 %v25, 16
    %v28 = vpop.permute.xlu0 %27
    %vm30 = vcmask 130048
    %v31 = vsel %vm30, %v24, %v28
    %v32 = vld [vmem:[%s2] sm:$0xff]
    %v33 = vld [vmem:[%s2 + $0x8] sm:$0xff]
    %v34 = vld [vmem:[%s2 + $0x10] sm:$0xff]
    %v35 = vld [vmem:[%s2 + $0x18] sm:$0xff]
    %v36 = vld [vmem:[%s2 + $0x20] sm:$0xff]
    %v37 = vld [vmem:[%s3] sm:$0x1]
    %v39 = vlaneseq
    %v40 = vshrl.u32 %v39, 7
    %v41 = vsub.s32 0, %v40
    %v42 = vrot.slane %v37, %v41
    %vm44 = vcmask 326656
    %v46 = vsel %vm44, %v31, 0
    %48 = vmatprep.subr.mxu0 0.0
    %49 = vmatpush1.msra.mxu0 %v32
    %50 = vmatprep.subr.mxu0 0.0
    %51 = vmatpush1.msra.mxu0 %v33
    %52 = vmatprep.subr.mxu0 0.0
    %53 = vmatpush1.msra.mxu0 %v34
    %54 = vmatprep.subr.mxu0 0.0
    %55 = vmatpush1.msra.mxu0 %v35
    %56 = vmatprep.subr.mxu0 0.0
    %57 = vmatpush1.msra.mxu0 %v36
    %58 = vmatprep.subr.mxu0 0.0
    %59 = vmatpush1.msra.mxu0 0.0
    %60 = vmatprep.subr.mxu0 0.0
    %61 = vmatpush1.msra.mxu0 0.0
    %62 = vmatprep.subr.mxu0 0.0
    %63 = vmatpush1.msra.mxu0 0.0
    %64 = vmatprep.subr.mxu0 0.0
    %65 = vmatpush1.msra.mxu0 0.0
    %66 = vmatprep.subr.mxu0 0.0
    %67 = vmatpush1.msra.mxu0 0.0
    %68 = vmatprep.subr.mxu0 0.0
    %69 = vmatpush1.msra.mxu0 0.0
    %70 = vmatprep.subr.mxu0 0.0
    %71 = vmatpush1.msra.mxu0 0.0
    %72 = vmatprep.subr.mxu0 0.0
    %73 = vmatpush1.msra.mxu0 0.0
    %74 = vmatprep.subr.mxu0 0.0
    %75 = vmatpush1.msra.mxu0 0.0
    %76 = vmatprep.subr.mxu0 0.0
    %77 = vmatpush1.msra.mxu0 0.0
    %78 = vmatprep.subr.mxu0 0.0
    %79 = vmatpush1.msra.mxu0 0.0
    %80 = vmatprep.subr.mxu0 0.0
    %81 = vmatpush1.msra.mxu0 0.0
    %82 = vmatprep.subr.mxu0 0.0
    %83 = vmatpush1.msra.mxu0 0.0
    %84 = vmatprep.subr.mxu0 0.0
    %85 = vmatpush1.msra.mxu0 0.0
    %86 = vmatprep.subr.mxu0 0.0
    %87 = vmatpush1.msra.mxu0 0.0
    %88 = vmatprep.subr.mxu0 0.0
    %89 = vmatpush1.msra.mxu0 0.0
    %90 = vmatprep.subr.mxu0 0.0
    %91 = vmatpush1.msra.mxu0 0.0
    %92 = vmatprep.subr.mxu0 0.0
    %93 = vmatpush1.msra.mxu0 0.0
    %94 = vmatprep.subr.mxu0 0.0
    %95 = vmatpush1.msra.mxu0 0.0
    %96 = vmatprep.subr.mxu0 0.0
    %97 = vmatpush1.msra.mxu0 0.0
    %98 = vmatprep.subr.mxu0 0.0
    %99 = vmatpush1.msra.mxu0 0.0
    %100 = vmatprep.subr.mxu0 0.0
    %101 = vmatpush1.msra.mxu0 0.0
    %102 = vmatprep.subr.mxu0 0.0
    %103 = vmatpush1.msra.mxu0 0.0
    %104 = vmatprep.subr.mxu0 0.0
    %105 = vmatpush1.msra.mxu0 0.0
    %106 = vmatprep.subr.mxu0 0.0
    %107 = vmatpush1.msra.mxu0 0.0
    %108 = vmatprep.subr.mxu0 0.0
    %109 = vmatpush1.msra.mxu0 0.0
    %110 = vmatprep.subr.mxu0 0.0
    %111 = vmatpush1.msra.mxu0 0.0
    %112 = vmatprep.mubr.f32.mxu0 0.0
    %113 = vmatmul.mubr.f32.gmra.mrb[0].mxu0 %v46
    %v114 = vpop.f32.mrb[0].mxu0
    %v115 = vadd.f32 %v42, %v114
    %v116 = vpop.f32.mrb[0].mxu0
    %117 = vdwg.mxu0
    %v118 = vmax.f32 %v115, 0.0
    %v119 = vld [vmem:[%s4] sm:$0xff]
    %v120 = vld [vmem:[%s4 + $0x8] sm:$0xff]
    %v121 = vld [vmem:[%s4 + $0x10] sm:$0xff]
    %v122 = vld [vmem:[%s4 + $0x18] sm:$0xff]
    %v123 = vld [vmem:[%s4 + $0x20] sm:$0xff]
    %v124 = vld [vmem:[%s4 + $0x28] sm:$0xff]
    %v125 = vld [vmem:[%s4 + $0x30] sm:$0xff]
    %v126 = vld [vmem:[%s4 + $0x38] sm:$0xff]
    %v127 = vld [vmem:[%s5] sm:$0x1]
    %v129 = vlaneseq
    %v130 = vshrl.u32 %v129, 7
    %v131 = vsub.s32 0, %v130
    %v132 = vrot.slane %v127, %v131
    %vm134 = vcmask 523264
    %v136 = vsel %vm134, %v118, 0
    %138 = vmatprep.subr.mxu0 0.0
    %139 = vmatpush1.msra.mxu0 %v119
    %140 = vmatprep.subr.mxu0 0.0
    %141 = vmatpush1.msra.mxu0 %v120
    %142 = vmatprep.subr.mxu0 0.0
    %143 = vmatpush1.msra.mxu0 %v121
    %144 = vmatprep.subr.mxu0 0.0
    %145 = vmatpush1.msra.mxu0 %v122
    %146 = vmatprep.subr.mxu0 0.0
    %147 = vmatpush1.msra.mxu0 %v123
    %148 = vmatprep.subr.mxu0 0.0
    %149 = vmatpush1.msra.mxu0 %v124
    %150 = vmatprep.subr.mxu0 0.0
    %151 = vmatpush1.msra.mxu0 %v125
    %152 = vmatprep.subr.mxu0 0.0
    %153 = vmatpush1.msra.mxu0 %v126
    %154 = vmatprep.subr.mxu0 0.0
    %155 = vmatpush1.msra.mxu0 0.0
    %156 = vmatprep.subr.mxu0 0.0
    %157 = vmatpush1.msra.mxu0 0.0
    %158 = vmatprep.subr.mxu0 0.0
    %159 = vmatpush1.msra.mxu0 0.0
    %160 = vmatprep.subr.mxu0 0.0
    %161 = vmatpush1.msra.mxu0 0.0
    %162 = vmatprep.subr.mxu0 0.0
    %163 = vmatpush1.msra.mxu0 0.0
    %164 = vmatprep.subr.mxu0 0.0
    %165 = vmatpush1.msra.mxu0 0.0
    %166 = vmatprep.subr.mxu0 0.0
    %167 = vmatpush1.msra.mxu0 0.0
    %168 = vmatprep.subr.mxu0 0.0
    %169 = vmatpush1.msra.mxu0 0.0
    %170 = vmatprep.subr.mxu0 0.0
    %171 = vmatpush1.msra.mxu0 0.0
    %172 = vmatprep.subr.mxu0 0.0
    %173 = vmatpush1.msra.mxu0 0.0
    %174 = vmatprep.subr.mxu0 0.0
    %175 = vmatpush1.msra.mxu0 0.0
    %176 = vmatprep.subr.mxu0 0.0
    %177 = vmatpush1.msra.mxu0 0.0
    %178 = vmatprep.subr.mxu0 0.0
    %179 = vmatpush1.msra.mxu0 0.0
    %180 = vmatprep.subr.mxu0 0.0
    %181 = vmatpush1.msra.mxu0 0.0
    %182 = vmatprep.subr.mxu0 0.0
    %183 = vmatpush1.msra.mxu0 0.0
    %184 = vmatprep.subr.mxu0 0.0
    %185 = vmatpush1.msra.mxu0 0.0
    %186 = vmatprep.subr.mxu0 0.0
    %187 = vmatpush1.msra.mxu0 0.0
    %188 = vmatprep.subr.mxu0 0.0
    %189 = vmatpush1.msra.mxu0 0.0
    %190 = vmatprep.subr.mxu0 0.0
    %191 = vmatpush1.msra.mxu0 0.0
    %192 = vmatprep.subr.mxu0 0.0
    %193 = vmatpush1.msra.mxu0 0.0
    %194 = vmatprep.subr.mxu0 0.0
    %195 = vmatpush1.msra.mxu0 0.0
    %196 = vmatprep.subr.mxu0 0.0
    %197 = vmatpush1.msra.mxu0 0.0
    %198 = vmatprep.subr.mxu0 0.0
    %199 = vmatpush1.msra.mxu0 0.0
    %200 = vmatprep.subr.mxu0 0.0
    %201 = vmatpush1.msra.mxu0 0.0
    %202 = vmatprep.mubr.f32.mxu0 0.0
    %203 = vmatmul.mubr.f32.gmra.mrb[0].mxu0 %v136
    %v204 = vpop.f32.mrb[0].mxu0
    %v205 = vadd.f32 %v132, %v204
    %v206 = vpop.f32.mrb[0].mxu0
    %207 = vdwg.mxu0
    %vm208 = vcmask 64512
    %209 = vst.msk [vmem:[#allocation2] sm:$0xff] %vm208, %v205
    // Predicated region
    $region26: #{complete_module_forward.1} parent=1 // pred_check
      _
    $region27: #{complete_module_forward.1} parent=1 // pred_check_branch
      %211 = sbr.rel (0) target = $region29
    $region28: #{complete_module_forward.1} parent=1 // pred_region
      %s213 = ssub.s32 128, 128
      %214 = vsyncadd [#allocation3], %s213
      %s216 = sshll.u32 [#allocation2], 4
      %s217 = int_to_ptr.vmem [resolvable:$true] %s216
      %219 = dma.vmem_to_hbm [thread:$0]  %s217, 128, %s6, [#allocation3]
    $region29: #{complete_module_forward.1} parent=1 // pred_fallthru
      _
    // Predicated region
    $region30: #{complete_module_forward.1} parent=1 // pred_check
      _
    $region31: #{complete_module_forward.1} parent=1 // pred_check_branch
      %221 = sbr.rel (0) target = $region33
    $region32: #{complete_module_forward.1} parent=1 // pred_region
      %222 = dma.done [#allocation3], 128
    $region33: #{complete_module_forward.1} parent=1 // pred_fallthru
      _
    %223 = vsyncpa [#allocation3], 1

</llo_original>
